<compile_context>
chip_gen: v5e
topology: v5e:2x2
jax: 0.10.0
libtpu: 0.0.40
codegen_flags: <defaults>
</compile_context>

<pallas_src>
import jax
import jax.numpy as jnp
from jax.experimental import pallas as pl
from jax.experimental.pallas import tpu as pltpu

_VMEM_BUDGET = 40 * 1024 * 1024   # conservative; leaves headroom on v7x (64 MiB)


# ----------------------------------------------------------------------------
# Helpers
# ----------------------------------------------------------------------------
def _round_up(v, m):
    return (v + m - 1) // m * m


def _largest_tile(n_p, cap):
    """Largest multiple of 128 that is <= cap and divides n_p (n_p % 128 == 0)."""
    t = max(128, (min(cap, n_p) // 128) * 128)
    while n_p % t:
        t -= 128
    return t


def _vmem_need(tm, tk, n_p, cout_p, resident_hg):
    a = 3 * tm * tk * 2                 # A_norm tiles, up to 3 buffers, bf16
    hs = 2 * tm * cout_p * 2            # H_skip tiles, double buffered, bf16
    out = 2 * tm * cout_p * 4           # f32 output / accumulator tiles
    b = 2 * cout_p * 4                  # merged bias
    hg = n_p * cout_p * 2 if resident_hg else 2 * tk * cout_p * 2
    return a + hs + out + b + hg


def _buffered_spec(block_shape, index_map, buffers):
    """BlockSpec with multi-buffering when this JAX version supports it."""
    try:
        return pl.BlockSpec(block_shape, index_map,
                            pipeline_mode=pl.Buffered(buffers))
    except TypeError:
        return pl.BlockSpec(block_shape, index_map)


# ----------------------------------------------------------------------------
# Kernels
# ----------------------------------------------------------------------------
def _project_kernel(x_ref, w_ref, o_ref):
    # H2[i] = X[i] @ [W_gcn^T | W_lin^T]   ([t, Cin_pad] @ [Cin_pad, 2*Cout_pad])
    o_ref[...] = jnp.dot(
        x_ref[...], w_ref[...], preferred_element_type=jnp.float32
    ).astype(o_ref.dtype)


def _make_aggregate_kernel(tk, resident_hg):
    def kernel(a_ref, hg_ref, hs_ref, b_ref, o_ref):
        k = pl.program_id(1)

        @pl.when(k == 0)
        def _init():
            o_ref[...] = jnp.zeros_like(o_ref)

        if resident_hg:
            # H_gcn fully VMEM-resident: slice the k-th reduction tile in-kernel.
            start = pl.multiple_of(k * tk, 128)
            hg = hg_ref[pl.ds(start, tk), :]
        else:
            hg = hg_ref[...]

        # acc[i] += A_norm[i, k] @ H_gcn[k]  (accumulate in the f32 output block)
        o_ref[...] += jnp.dot(a_ref[...], hg, preferred_element_type=jnp.float32)

        @pl.when(k == pl.num_programs(1) - 1)
        def _finalize():
            z = o_ref[...] + hs_ref[...].astype(jnp.float32) + b_ref[...]
            # mish(z) = z * tanh(softplus(z)) = z * (e^2 + 2e) / (e^2 + 2e + 2)
            e = jnp.exp(jnp.minimum(z, 20.0))       # z > 20  =>  mish(z) ~= z
            num = e * (e + 2.0)
            o_ref[...] = z * (num * pl.reciprocal(num + 2.0, approx=True))

    return kernel


# ----------------------------------------------------------------------------
# Wrapper
# ----------------------------------------------------------------------------
def gcn_layer_with_skip(x, a_norm, w_gcn, b_gcn, w_lin, b_lin,
                        *, block_m=2048, block_k=512):
    """x: [N, Cin] f32, a_norm: [N, N] f32, w_*: [Cout, Cin], b_*: [Cout]."""
    n, cin = x.shape
    cout = w_gcn.shape[0]

    cin_p = _round_up(cin, 128)
    cout_p = _round_up(cout, 128)

    n128 = _round_up(n, 128)
    tk = min(block_k, n128)
    n_p = _round_up(n128, tk)

    # Row tile: large (amortizes per-step overhead and H_gcn re-reads) but kept
    # <= n_p/2 so the "parallel" axis can split across v7x's two TensorCores.
    tm_cap = block_m if n_p < 256 else min(block_m, n_p // 2)
    tm = _largest_tile(n_p, tm_cap)
    while tm > 128 and _vmem_need(tm, tk, n_p, cout_p, False) > _VMEM_BUDGET:
        tm = _largest_tile(n_p, tm - 128)

    resident_hg = _vmem_need(tm, tk, n_p, cout_p, True) <= _VMEM_BUDGET
    vmem_need = _vmem_need(tm, tk, n_p, cout_p, resident_hg)
    vmem_limit = int(min(max(vmem_need * 5 // 4 + (2 << 20), 32 << 20), 56 << 20))

    # --- layout plumbing (wrapper-side, once) --------------------------------
    xp = jnp.zeros((n_p, cin_p), jnp.bfloat16).at[:n, :cin].set(
        x.astype(jnp.bfloat16))
    ap = jnp.zeros((n_p, n_p), jnp.bfloat16).at[:n, :n].set(
        a_norm.astype(jnp.bfloat16))
    # Pre-transposed + concatenated weights: [Cin_pad, 2*Cout_pad].
    w_cat = jnp.zeros((cin_p, 2 * cout_p), jnp.bfloat16)
    w_cat = w_cat.at[:cin, :cout].set(w_gcn.T.astype(jnp.bfloat16))
    w_cat = w_cat.at[:cin, cout_p:cout_p + cout].set(w_lin.T.astype(jnp.bfloat16))
    # Merged biases (added once at finalize, kept f32).
    bias = jnp.zeros((1, cout_p), jnp.float32).at[:, :cout].set(
        jnp.reshape((b_gcn + b_lin).astype(jnp.float32), (1, cout)))

    # --- stage 1: fused projection  H2 = X @ [Wg^T | Wl^T] -------------------
    tproj = _largest_tile(n_p, 512)
    h2 = pl.pallas_call(
        _project_kernel,
        out_shape=jax.ShapeDtypeStruct((n_p, 2 * cout_p), jnp.bfloat16),
        grid_spec=pltpu.PrefetchScalarGridSpec(
            num_scalar_prefetch=0,
            grid=(n_p // tproj,),
            in_specs=[
                pl.BlockSpec((tproj, cin_p), lambda i: (i, 0)),
                pl.BlockSpec((cin_p, 2 * cout_p), lambda i: (0, 0)),
            ],
            out_specs=pl.BlockSpec((tproj, 2 * cout_p), lambda i: (i, 0)),
        ),
        compiler_params=pltpu.CompilerParams(
            dimension_semantics=("parallel",)),
    )(xp, w_cat)

    # --- stage 2: tiled A_norm reduction + bias + skip + Mish ----------------
    # H2 is passed twice; the GCN half (block column 0) and the skip half
    # (block column 1) are selected purely by BlockSpec index_maps, so no
    # wrapper-side slice copies hit HBM.
    if resident_hg:
        hg_spec = pl.BlockSpec((n_p, cout_p), lambda i, k: (0, 0))
    else:
        hg_spec = pl.BlockSpec((tk, cout_p), lambda i, k: (k, 0))

    n_row_tiles = n_p // tm
    n_red_tiles = n_p // tk
    hg_hbm_reads = 1 if resident_hg else n_row_tiles
    cost = pl.CostEstimate(
        flops=2 * n_p * n_p * cout_p,
        transcendentals=n_p * cout_p,
        bytes_accessed=(n_p * n_p * 2                       # A_norm (bf16)
                        + hg_hbm_reads * n_p * cout_p * 2   # H_gcn (bf16)
                        + n_p * cout_p * 2                  # H_skip (bf16)
                        + n_p * cout_p * 4                  # output (f32)
                        + cout_p * 4),                      # merged bias
    )

    out_p = pl.pallas_call(
        _make_aggregate_kernel(tk, resident_hg),
        out_shape=jax.ShapeDtypeStruct((n_p, cout_p), jnp.float32),
        grid_spec=pltpu.PrefetchScalarGridSpec(
            num_scalar_prefetch=0,
            grid=(n_row_tiles, n_red_tiles),  # (row tile i, reduction tile k)
            in_specs=[
                _buffered_spec((tm, tk), lambda i, k: (i, k), 3),   # A_norm
                hg_spec,                                            # H_gcn (h2)
                pl.BlockSpec((tm, cout_p), lambda i, k: (i, 1)),    # H_skip (h2)
                pl.BlockSpec((1, cout_p), lambda i, k: (0, 0)),     # merged bias
            ],
            out_specs=pl.BlockSpec((tm, cout_p), lambda i, k: (i, 0)),
        ),
        compiler_params=pltpu.CompilerParams(
            dimension_semantics=("parallel", "arbitrary"),
            vmem_limit_bytes=vmem_limit),
        cost_estimate=cost,
    )(ap, h2, h2, bias)

    return out_p[:n, :cout]


# ----------------------------------------------------------------------------
# Glue: edge_index -> dense normalized adjacency (plain JAX, not a kernel)
# ----------------------------------------------------------------------------
def build_normalized_adjacency(edge_index, num_nodes):
    """Dense D^{-1/2} (A + I) D^{-1/2}, matching PyG gcn_norm with unit weights.

    edge_index: int32 [2, E], row 0 = source j, row 1 = target i.
    Duplicate edges scatter-ADD (as in PyG), so a repeated edge counts twice.
    """
    src, dst = edge_index[0], edge_index[1]
    a = jnp.zeros((num_nodes, num_nodes), jnp.float32)
    a = a.at[dst, src].add(1.0)                      # message j -> i at [i, j]
    a = a + jnp.eye(num_nodes, dtype=jnp.float32)    # self-loops
    deg = a.sum(axis=1)                              # degree at targets
    dinv = jnp.where(deg > 0, 1.0 / jnp.sqrt(deg), 0.0)
    return dinv[:, None] * a * dinv[None, :]


# ----------------------------------------------------------------------------
# Demo / self-check
# ----------------------------------------------------------------------------
if __name__ == "__main__":
    num_nodes = 8
    in_channels = 16
    out_channels = 32
    num_edges = 20

    key = jax.random.PRNGKey(0)
    kx, ke, kwg, kbg, kwl, kbl = jax.random.split(key, 6)

    x = jax.random.normal(kx, (num_nodes, in_channels), jnp.float32)
    edge_index = jax.random.randint(ke, (2, num_edges), 0, num_nodes, jnp.int32)

    # Deterministic synthetic parameters (GCNConv weight/bias + Linear weight/bias)
    w_gcn = 0.1 * jax.random.normal(kwg, (out_channels, in_channels), jnp.float32)
    b_gcn = 0.1 * jax.random.normal(kbg, (out_channels,), jnp.float32)
    w_lin = 0.1 * jax.random.normal(kwl, (out_channels, in_channels), jnp.float32)
    b_lin = 0.1 * jax.random.normal(kbl, (out_channels,), jnp.float32)

    a_norm = build_normalized_adjacency(edge_index, num_nodes)

    out = gcn_layer_with_skip(x, a_norm, w_gcn, b_gcn, w_lin, b_lin)
    jax.block_until_ready(out)

    # Pure-JAX f32 reference (kernel streams bf16 operands with f32 accumulation,
    # so compare with a bf16-appropriate tolerance).
    z_ref = (a_norm @ (x @ w_gcn.T) + b_gcn) + (x @ w_lin.T + b_lin)
    ref = z_ref * jnp.tanh(jax.nn.softplus(z_ref))
    assert out.shape == ref.shape
    assert jnp.allclose(out, ref, atol=5e-2, rtol=5e-2), (
        float(jnp.max(jnp.abs(out - ref))))

    print("KERNEL_OK")
</pallas_src>

<mosaic_0001>
module attributes {stable_mosaic.version = 11 : i64} {
  func.func @_project_kernel(%arg0: i32, %arg1: memref<128x128xbf16, #tpu.memory_space<vmem>>, %arg2: memref<128x256xbf16, #tpu.memory_space<vmem>>, %arg3: memref<128x256xbf16, #tpu.memory_space<vmem>>) attributes {dimension_semantics = [#tpu.dimension_semantics<parallel>], iteration_bounds = array<i64: 1>, scalar_prefetch = 0 : i64, scratch_operands = 0 : i64, tpu.core_type = #tpu.core_type<tc>, window_params = [{transform_indices = @transform_0, window_bounds = array<i64: 128, 128>}, {pipeline_mode = #tpu.pipeline_mode<synchronous>, transform_indices = @transform_1, window_bounds = array<i64: 128, 256>}, {transform_indices = @transform_2, window_bounds = array<i64: 128, 256>}]} {
    %c0 = arith.constant 0 : index
    %c0_0 = arith.constant 0 : index
    %0 = vector.load %arg1[%c0, %c0_0] : memref<128x128xbf16, #tpu.memory_space<vmem>>, vector<128x128xbf16>
    %c0_1 = arith.constant 0 : index
    %c0_2 = arith.constant 0 : index
    %1 = vector.load %arg2[%c0_1, %c0_2] : memref<128x256xbf16, #tpu.memory_space<vmem>>, vector<128x256xbf16>
    %cst = arith.constant dense<0.000000e+00> : vector<128x256xf32>
    %2 = tpu.matmul %0, %1, %cst {dimension_numbers = #tpu.dot_dimension_numbers<[1], [0], [0], [1], [0, 0, 1, 1], [], []>} : vector<128x128xbf16>, vector<128x256xbf16>, vector<128x256xf32> -> vector<128x256xf32>
    %3 = arith.truncf %2 : vector<128x256xf32> to vector<128x256xbf16>
    %c0_3 = arith.constant 0 : index
    %c0_4 = arith.constant 0 : index
    %4 = vector.load %arg3[%c0_3, %c0_4] : memref<128x256xbf16, #tpu.memory_space<vmem>>, vector<128x256xbf16>
    tpu.vector_store %arg3[%c0_3, %c0_4], %3 {strides = array<i32>} : memref<128x256xbf16, #tpu.memory_space<vmem>>, vector<128x256xbf16>,
    return
  }
  func.func @transform_0(%arg0: i32) -> (i32, i32) {
    %c0_i32 = arith.constant 0 : i32
    %c0_i32_0 = arith.constant 0 : i32
    return %arg0, %c0_i32 : i32, i32
  }
  func.func @transform_1(%arg0: i32) -> (i32, i32) {
    %c0_i32 = arith.constant 0 : i32
    %c0_i32_0 = arith.constant 0 : i32
    %c0_i32_1 = arith.constant 0 : i32
    return %c0_i32, %c0_i32_0 : i32, i32
  }
  func.func @transform_2(%arg0: i32) -> (i32, i32) {
    %c0_i32 = arith.constant 0 : i32
    %c0_i32_0 = arith.constant 0 : i32
    return %arg0, %c0_i32 : i32, i32
  }
}

</mosaic_0001>

<llo_original>
// kernel: tpu_custom_call.1
$region0: #{tpu_custom_call.1}
  #allocation0 [shape = 'u32[]', space=smem, size = 0x4, offset = 0x4, fixed_abs, tag = 'smem constant byte address 0x4 - core index']
  #allocation1 [shape = 'u32[72,128]{1,0:T(1,128)}', space=vmem, size = 0x9000, scoped, tag = 'internal scratch']
  %s0 = inlined_call_operand.hbm [shape: bf16[128,128], index: 0, kind: input, shape index: {}]
  %s1 = inlined_call_operand.hbm [shape: bf16[128,256], index: 1, kind: input, shape index: {}]
  %s2 = inlined_call_operand.hbm [shape: bf16[128,256], index: 2, kind: output, shape index: {}]
  %s3 = sld [smem:[#allocation0]]
  $region26: #{tpu_custom_call.1} parent=0
    _
  %s5 = ssub.s32 1, %s3
  %s6 = scalar_select 0, %s5, %s3
  $region1: #{tpu_custom_call.1} parent=0
    #allocation2 [shape = 'u8[32768]{0}', space=vmem, size = 0x8000, scoped, tag = 'input window, operand 0, single buffered']
    #allocation3 [shape = 's32[1]{0}', space=sflag, size = 0x4, scoped, tag = 'scoped memory for tpu_custom_call.1']
    #allocation4 [shape = 's32[1]{0}', space=sflag, size = 0x4, scoped, tag = 'scoped memory for tpu_custom_call.1']
    #allocation5 [shape = 'u8[65536]{0}', space=vmem, size = 0x10000, scoped, tag = 'input window, operand 1, single buffered']
    #allocation6 [shape = 's32[1]{0}', space=sflag, size = 0x4, scoped, tag = 'scoped memory for tpu_custom_call.1']
    #allocation7 [shape = 'u8[65536]{0}', space=vmem, size = 0x10000, scoped, tag = 'output window, operand 0, single buffered']
    %7 = vsyncpa [#allocation3], 0
    %8 = vsyncpa [#allocation6], 0
    %9 = vsyncpa [#allocation4], 0
    // Predicated region
    $region2: #{tpu_custom_call.1} parent=1 // pred_check
      _
    $region3: #{tpu_custom_call.1} parent=1 // pred_check_branch
      %11 = sbr.rel (0) target = $region5
    $region4: #{tpu_custom_call.1} parent=1 // pred_region
      %13 = vsyncadd [#allocation3], 0
      %s14 = sshll.u32 %s0, 4
      %s15 = int_to_ptr.hbm [resolvable:$true] %s14
      %s16 = sshll.u32 [#allocation2], 4
      %s17 = int_to_ptr.vmem [resolvable:$true] %s16
      %22 = dma.hbm_to_vmem [thread:$0]  %s15, 1024, %s17, [#allocation3], 64, 64, 4
    $region5: #{tpu_custom_call.1} parent=1 // pred_fallthru
      _
    // Predicated region
    $region6: #{tpu_custom_call.1} parent=1 // pred_check
      _
    $region7: #{tpu_custom_call.1} parent=1 // pred_check_branch
      %24 = sbr.rel (0) target = $region9
    $region8: #{tpu_custom_call.1} parent=1 // pred_region
      %26 = vsyncadd [#allocation6], 0
      %s27 = sshll.u32 %s1, 4
      %s28 = int_to_ptr.hbm [resolvable:$true] %s27
      %s29 = sshll.u32 [#allocation5], 4
      %s30 = int_to_ptr.vmem [resolvable:$true] %s29
      %35 = dma.hbm_to_vmem [thread:$0]  %s28, 2048, %s30, [#allocation6], 128, 128, 8
    $region9: #{tpu_custom_call.1} parent=1 // pred_fallthru
      _
    // Predicated region
    $region10: #{tpu_custom_call.1} parent=1 // pred_check
      _
    $region11: #{tpu_custom_call.1} parent=1 // pred_check_branch
      %37 = sbr.rel (0) target = $region13
    $region12: #{tpu_custom_call.1} parent=1 // pred_region
      %39 = dma.done [#allocation3], 1024
    $region13: #{tpu_custom_call.1} parent=1 // pred_fallthru
      _
    // Predicated region
    $region14: #{tpu_custom_call.1} parent=1 // pred_check
      _
    $region15: #{tpu_custom_call.1} parent=1 // pred_check_branch
      %41 = sbr.rel (0) target = $region17
    $region16: #{tpu_custom_call.1} parent=1 // pred_region
      %43 = dma.done [#allocation6], 2048
    $region17: #{tpu_custom_call.1} parent=1 // pred_fallthru
      _
    %v44 = vld [vmem:[#allocation2] sm:$0xf]
    %v45 = vld [vmem:[#allocation2 + $0x4] sm:$0xf]
    %v46 = vld [vmem:[#allocation2 + $0x8] sm:$0xf]
    %v47 = vld [vmem:[#allocation2 + $0xc] sm:$0xf]
    %v48 = vld [vmem:[#allocation2 + $0x10] sm:$0xf]
    %v49 = vld [vmem:[#allocation2 + $0x14] sm:$0xf]
    %v50 = vld [vmem:[#allocation2 + $0x18] sm:$0xf]
    %v51 = vld [vmem:[#allocation2 + $0x1c] sm:$0xf]
    %v52 = vld [vmem:[#allocation2 + $0x20] sm:$0xf]
    %v53 = vld [vmem:[#allocation2 + $0x24] sm:$0xf]
    %v54 = vld [vmem:[#allocation2 + $0x28] sm:$0xf]
    %v55 = vld [vmem:[#allocation2 + $0x2c] sm:$0xf]
    %v56 = vld [vmem:[#allocation2 + $0x30] sm:$0xf]
    %v57 = vld [vmem:[#allocation2 + $0x34] sm:$0xf]
    %v58 = vld [vmem:[#allocation2 + $0x38] sm:$0xf]
    %v59 = vld [vmem:[#allocation2 + $0x3c] sm:$0xf]
    %v60 = vld [vmem:[#allocation5] sm:$0xff]
    %v61 = vld [vmem:[#allocation5 + $0x8] sm:$0xff]
    %v62 = vld [vmem:[#allocation5 + $0x10] sm:$0xff]
    %v63 = vld [vmem:[#allocation5 + $0x18] sm:$0xff]
    %v64 = vld [vmem:[#allocation5 + $0x20] sm:$0xff]
    %v65 = vld [vmem:[#allocation5 + $0x28] sm:$0xff]
    %v66 = vld [vmem:[#allocation5 + $0x30] sm:$0xff]
    %v67 = vld [vmem:[#allocation5 + $0x38] sm:$0xff]
    %v68 = vld [vmem:[#allocation5 + $0x40] sm:$0xff]
    %v69 = vld [vmem:[#allocation5 + $0x48] sm:$0xff]
    %v70 = vld [vmem:[#allocation5 + $0x50] sm:$0xff]
    %v71 = vld [vmem:[#allocation5 + $0x58] sm:$0xff]
    %v72 = vld [vmem:[#allocation5 + $0x60] sm:$0xff]
    %v73 = vld [vmem:[#allocation5 + $0x68] sm:$0xff]
    %v74 = vld [vmem:[#allocation5 + $0x70] sm:$0xff]
    %v75 = vld [vmem:[#allocation5 + $0x78] sm:$0xff]
    %v92 = vunpack.c.l.b16 %v44
    %v93 = vunpack.c.l.b16 %v45
    %v94 = vunpack.c.l.b16 %v46
    %v95 = vunpack.c.l.b16 %v47
    %v96 = vunpack.c.l.b16 %v48
    %v97 = vunpack.c.l.b16 %v49
    %v98 = vunpack.c.l.b16 %v50
    %v99 = vunpack.c.l.b16 %v51
    %v100 = vunpack.c.l.b16 %v52
    %v101 = vunpack.c.l.b16 %v53
    %v102 = vunpack.c.l.b16 %v54
    %v103 = vunpack.c.l.b16 %v55
    %v104 = vunpack.c.l.b16 %v56
    %v105 = vunpack.c.l.b16 %v57
    %v106 = vunpack.c.l.b16 %v58
    %v107 = vunpack.c.l.b16 %v59
    %v108 = vpack.c.b16 %v93, %v92
    %v109 = vpack.c.b16 %v95, %v94
    %v110 = vpack.c.b16 %v97, %v96
    %v111 = vpack.c.b16 %v99, %v98
    %v112 = vpack.c.b16 %v101, %v100
    %v113 = vpack.c.b16 %v103, %v102
    %v114 = vpack.c.b16 %v105, %v104
    %v115 = vpack.c.b16 %v107, %v106
    %v140 = vunpack.c.l.b16 %v60
    %v141 = vunpack.c.h.b16 %v60
    %v142 = vunpack.c.l.b16 %v61
    %v143 = vunpack.c.h.b16 %v61
    %v144 = vunpack.c.l.b16 %v62
    %v145 = vunpack.c.h.b16 %v62
    %v146 = vunpack.c.l.b16 %v63
    %v147 = vunpack.c.h.b16 %v63
    %v148 = vunpack.c.l.b16 %v64
    %v149 = vunpack.c.h.b16 %v64
    %v150 = vunpack.c.l.b16 %v65
    %v151 = vunpack.c.h.b16 %v65
    %v152 = vunpack.c.l.b16 %v66
    %v153 = vunpack.c.h.b16 %v66
    %v154 = vunpack.c.l.b16 %v67
    %v155 = vunpack.c.h.b16 %v67
    %v156 = vunpack.c.l.b16 %v68
    %v157 = vunpack.c.h.b16 %v68
    %v158 = vunpack.c.l.b16 %v69
    %v159 = vunpack.c.h.b16 %v69
    %v160 = vunpack.c.l.b16 %v70
    %v161 = vunpack.c.h.b16 %v70
    %v162 = vunpack.c.l.b16 %v71
    %v163 = vunpack.c.h.b16 %v71
    %v164 = vunpack.c.l.b16 %v72
    %v165 = vunpack.c.h.b16 %v72
    %v166 = vunpack.c.l.b16 %v73
    %v167 = vunpack.c.h.b16 %v73
    %v168 = vunpack.c.l.b16 %v74
    %v169 = vunpack.c.h.b16 %v74
    %v170 = vunpack.c.l.b16 %v75
    %v171 = vunpack.c.h.b16 %v75
    %v172 = vpack.c.b16 %v142, %v140
    %v173 = vpack.c.b16 %v143, %v141
    %v174 = vpack.c.b16 %v146, %v144
    %v175 = vpack.c.b16 %v147, %v145
    %v176 = vpack.c.b16 %v150, %v148
    %v177 = vpack.c.b16 %v151, %v149
    %v178 = vpack.c.b16 %v154, %v152
    %v179 = vpack.c.b16 %v155, %v153
    %v180 = vpack.c.b16 %v158, %v156
    %v181 = vpack.c.b16 %v159, %v157
    %v182 = vpack.c.b16 %v162, %v160
    %v183 = vpack.c.b16 %v163, %v161
    %v184 = vpack.c.b16 %v166, %v164
    %v185 = vpack.c.b16 %v167, %v165
    %v186 = vpack.c.b16 %v170, %v168
    %v187 = vpack.c.b16 %v171, %v169
    %204 = vmatpush.bf16.msra.mxu0 %v186
    %205 = vmatpush.bf16.msra.mxu0 %v184
    %206 = vmatpush.bf16.msra.mxu0 %v182
    %207 = vmatpush.bf16.msra.mxu0 %v180
    %208 = vmatpush.bf16.msra.mxu0 %v178
    %209 = vmatpush.bf16.msra.mxu0 %v176
    %210 = vmatpush.bf16.msra.mxu0 %v174
    %211 = vmatpush.bf16.msra.mxu0 %v172
    %212 = vmatmul.bf16.gmra.mxu0 %v108
    %v213 = vpop.f32.mrf.mxu0
    %v214 = vadd.f32 0.0, %v213
    %v215 = vpop.f32.mrf.mxu0
    %v216 = vadd.f32 0.0, %v215
    %217 = vmatmul.bf16.gmra.mxu0 %v109
    %v218 = vpop.f32.mrf.mxu0
    %v219 = vadd.f32 0.0, %v218
    %v220 = vpop.f32.mrf.mxu0
    %v221 = vadd.f32 0.0, %v220
    %222 = vmatmul.bf16.gmra.mxu0 %v110
    %v223 = vpop.f32.mrf.mxu0
    %v224 = vadd.f32 0.0, %v223
    %v225 = vpop.f32.mrf.mxu0
    %v226 = vadd.f32 0.0, %v225
    %227 = vmatmul.bf16.gmra.mxu0 %v111
    %v228 = vpop.f32.mrf.mxu0
    %v229 = vadd.f32 0.0, %v228
    %v230 = vpop.f32.mrf.mxu0
    %v231 = vadd.f32 0.0, %v230
    %232 = vmatmul.bf16.gmra.mxu0 %v112
    %v233 = vpop.f32.mrf.mxu0
    %v234 = vadd.f32 0.0, %v233
    %v235 = vpop.f32.mrf.mxu0
    %v236 = vadd.f32 0.0, %v235
    %237 = vmatmul.bf16.gmra.mxu0 %v113
    %v238 = vpop.f32.mrf.mxu0
    %v239 = vadd.f32 0.0, %v238
    %v240 = vpop.f32.mrf.mxu0
    %v241 = vadd.f32 0.0, %v240
    %242 = vmatmul.bf16.gmra.mxu0 %v114
    %v243 = vpop.f32.mrf.mxu0
    %v244 = vadd.f32 0.0, %v243
    %v245 = vpop.f32.mrf.mxu0
    %v246 = vadd.f32 0.0, %v245
    %247 = vmatmul.bf16.gmra.mxu0 %v115
    %v248 = vpop.f32.mrf.mxu0
    %v249 = vadd.f32 0.0, %v248
    %v250 = vpop.f32.mrf.mxu0
    %v251 = vadd.f32 0.0, %v250
    %252 = vdwg.mxu0
    %253 = vmatpush.bf16.msra.mxu0 %v187
    %254 = vmatpush.bf16.msra.mxu0 %v185
    %255 = vmatpush.bf16.msra.mxu0 %v183
    %256 = vmatpush.bf16.msra.mxu0 %v181
    %257 = vmatpush.bf16.msra.mxu0 %v179
    %258 = vmatpush.bf16.msra.mxu0 %v177
    %259 = vmatpush.bf16.msra.mxu0 %v175
    %260 = vmatpush.bf16.msra.mxu0 %v173
    %261 = vmatmul.bf16.gmra.mxu0 %v108
    %v262 = vpop.f32.mrf.mxu0
    %v263 = vadd.f32 0.0, %v262
    %v264 = vpop.f32.mrf.mxu0
    %v265 = vadd.f32 0.0, %v264
    %266 = vmatmul.bf16.gmra.mxu0 %v109
    %v267 = vpop.f32.mrf.mxu0
    %v268 = vadd.f32 0.0, %v267
    %v269 = vpop.f32.mrf.mxu0
    %v270 = vadd.f32 0.0, %v269
    %271 = vmatmul.bf16.gmra.mxu0 %v110
    %v272 = vpop.f32.mrf.mxu0
    %v273 = vadd.f32 0.0, %v272
    %v274 = vpop.f32.mrf.mxu0
    %v275 = vadd.f32 0.0, %v274
    %276 = vmatmul.bf16.gmra.mxu0 %v111
    %v277 = vpop.f32.mrf.mxu0
    %v278 = vadd.f32 0.0, %v277
    %v279 = vpop.f32.mrf.mxu0
    %v280 = vadd.f32 0.0, %v279
    %281 = vmatmul.bf16.gmra.mxu0 %v112
    %v282 = vpop.f32.mrf.mxu0
    %v283 = vadd.f32 0.0, %v282
    %v284 = vpop.f32.mrf.mxu0
    %v285 = vadd.f32 0.0, %v284
    %286 = vmatmul.bf16.gmra.mxu0 %v113
    %v287 = vpop.f32.mrf.mxu0
    %v288 = vadd.f32 0.0, %v287
    %v289 = vpop.f32.mrf.mxu0
    %v290 = vadd.f32 0.0, %v289
    %291 = vmatmul.bf16.gmra.mxu0 %v114
    %v292 = vpop.f32.mrf.mxu0
    %v293 = vadd.f32 0.0, %v292
    %v294 = vpop.f32.mrf.mxu0
    %v295 = vadd.f32 0.0, %v294
    %296 = vmatmul.bf16.gmra.mxu0 %v115
    %v297 = vpop.f32.mrf.mxu0
    %v298 = vadd.f32 0.0, %v297
    %v299 = vpop.f32.mrf.mxu0
    %v300 = vadd.f32 0.0, %v299
    %301 = vdwg.mxu0
    %v302 = vpack.c.bf16 %v263, %v214
    %v303 = vpack.c.bf16 %v265, %v216
    %v304 = vpack.c.bf16 %v268, %v219
    %v305 = vpack.c.bf16 %v270, %v221
    %v306 = vpack.c.bf16 %v273, %v224
    %v307 = vpack.c.bf16 %v275, %v226
    %v308 = vpack.c.bf16 %v278, %v229
    %v309 = vpack.c.bf16 %v280, %v231
    %v310 = vpack.c.bf16 %v283, %v234
    %v311 = vpack.c.bf16 %v285, %v236
    %v312 = vpack.c.bf16 %v288, %v239
    %v313 = vpack.c.bf16 %v290, %v241
    %v314 = vpack.c.bf16 %v293, %v244
    %v315 = vpack.c.bf16 %v295, %v246
    %v316 = vpack.c.bf16 %v298, %v249
    %v317 = vpack.c.bf16 %v300, %v251
    %318 = vst [vmem:[#allocation7] sm:$0xff] %v302
    %319 = vst [vmem:[#allocation7 + $0x8] sm:$0xff] %v303
    %320 = vst [vmem:[#allocation7 + $0x10] sm:$0xff] %v304
    %321 = vst [vmem:[#allocation7 + $0x18] sm:$0xff] %v305
    %322 = vst [vmem:[#allocation7 + $0x20] sm:$0xff] %v306
    %323 = vst [vmem:[#allocation7 + $0x28] sm:$0xff] %v307
    %324 = vst [vmem:[#allocation7 + $0x30] sm:$0xff] %v308
    %325 = vst [vmem:[#allocation7 + $0x38] sm:$0xff] %v309
    %326 = vst [vmem:[#allocation7 + $0x40] sm:$0xff] %v310
    %327 = vst [vmem:[#allocation7 + $0x48] sm:$0xff] %v311
    %328 = vst [vmem:[#allocation7 + $0x50] sm:$0xff] %v312
    %329 = vst [vmem:[#allocation7 + $0x58] sm:$0xff] %v313
    %330 = vst [vmem:[#allocation7 + $0x60] sm:$0xff] %v314
    %331 = vst [vmem:[#allocation7 + $0x68] sm:$0xff] %v315
    %332 = vst [vmem:[#allocation7 + $0x70] sm:$0xff] %v316
    %333 = vst [vmem:[#allocation7 + $0x78] sm:$0xff] %v317
    // Predicated region
    $region18: #{tpu_custom_call.1} parent=1 // pred_check
      _
    $region19: #{tpu_custom_call.1} parent=1 // pred_check_branch
      %335 = sbr.rel (0) target = $region21
    $region20: #{tpu_custom_call.1} parent=1 // pred_region
      %337 = vsyncadd [#allocation4], 0
      %s338 = sshll.u32 [#allocation7], 4
      %s339 = int_to_ptr.vmem [resolvable:$true] %s338
      %s340 = sshll.u32 %s2, 4
      %s341 = int_to_ptr.hbm [resolvable:$true] %s340
      %346 = dma.vmem_to_hbm [thread:$0]  %s339, 2048, %s341, [#allocation4], 128, 128, 8
    $region21: #{tpu_custom_call.1} parent=1 // pred_fallthru
      _
    // Predicated region
    $region22: #{tpu_custom_call.1} parent=1 // pred_check
      _
    $region23: #{tpu_custom_call.1} parent=1 // pred_check_branch
      %348 = sbr.rel (0) target = $region25
    $region24: #{tpu_custom_call.1} parent=1 // pred_region
      %350 = dma.done [#allocation4], 2048
    $region25: #{tpu_custom_call.1} parent=1 // pred_fallthru
      _
    %351 = vsyncpa [#allocation3], 1
    %352 = vsyncpa [#allocation6], 1
    %353 = vsyncpa [#allocation4], 1

</llo_original>
